<compile_context>
chip_gen: v5e
topology: v5e:2x2
jax: 0.10.0
libtpu: 0.0.40
codegen_flags: <defaults>
</compile_context>

<pallas_src>
import functools

import jax
import jax.numpy as jnp
from jax import lax
from jax.experimental import pallas as pl
from jax.experimental.pallas import tpu as pltpu

LN_EPS = 1e-5  # torch.nn.LayerNorm default


def _layernorm(h, gamma, beta):
    mean = jnp.mean(h, axis=-1, keepdims=True)
    centered = h - mean
    var = jnp.mean(centered * centered, axis=-1, keepdims=True)
    return centered * lax.rsqrt(var + LN_EPS) * gamma + beta


def actor_kernel(x_ref,
                 w1_ref, ln1_ref,
                 w2_ref, ln2_ref,
                 wmu_ref, bmu_ref,
                 o_ref):
    x = x_ref[...]                      # (block_b, in_dims), f32 or bf16

    # fc1 -> LayerNorm -> ReLU   (ln refs pack rows: 0=bias, 1=gamma, 2=beta)
    ln1 = ln1_ref[...]
    h = jnp.dot(x, w1_ref[...], preferred_element_type=jnp.float32) + ln1[0:1, :]
    h = _layernorm(h, ln1[1:2, :], ln1[2:3, :])
    h = jnp.maximum(h, 0.0)

    # fc2 -> LayerNorm -> ReLU
    ln2 = ln2_ref[...]
    h = jnp.dot(h.astype(w2_ref.dtype), w2_ref[...],
                preferred_element_type=jnp.float32) + ln2[0:1, :]
    h = _layernorm(h, ln2[1:2, :], ln2[2:3, :])
    h = jnp.maximum(h, 0.0)

    # mu -> tanh   (output columns are lane-padded to a multiple of 128;
    # the pad columns of wmu/bmu are zero, so tanh(0)=0 there -> harmless)
    out = jnp.dot(h.astype(wmu_ref.dtype), wmu_ref[...],
                  preferred_element_type=jnp.float32) + bmu_ref[...]
    o_ref[...] = jnp.tanh(out).astype(o_ref.dtype)


def _pick_block_b(B):
    """Largest multiple-of-8 divisor of B, capped at 512 and <= B/2 when B allows
    (>= 2 grid steps lets the 'parallel' batch axis use both v7x TensorCores)."""
    if B <= 8:
        return B
    cap = min(512, max(8, B // 2))
    for bb in range(cap - cap % 8, 7, -8):
        if B % bb == 0:
            return bb
    return B  # no aligned divisor: fall back to a single full-batch tile


@functools.partial(jax.jit, static_argnames=("block_b", "use_bf16_matmul"))
def actor_forward(state, params, *, block_b=None, use_bf16_matmul=False):
    """Fused forward pass of ActorNetwork.

    state:  (B, in_dims) float32
    params: dict with w1(in,f1) b1(1,f1) g1(1,f1) be1(1,f1)
                      w2(f1,f2) b2(1,f2) g2(1,f2) be2(1,f2)
                      wmu(f2,n) bmu(1,n)
    """
    B, in_dims = state.shape
    f1 = params["w1"].shape[1]
    f2 = params["w2"].shape[1]
    n_actions = params["wmu"].shape[1]
    n_pad = 128 * ((n_actions + 127) // 128)     # lane-dense output width

    if block_b is None:
        block_b = _pick_block_b(B)
    assert B % block_b == 0, (B, block_b)

    mm_dtype = jnp.bfloat16 if use_bf16_matmul else jnp.float32
    mm_isize = jnp.dtype(mm_dtype).itemsize

    # Matmul inputs (optionally bf16); LN / bias params always f32.
    x = state.astype(mm_dtype)
    w1 = params["w1"].astype(mm_dtype)
    w2 = params["w2"].astype(mm_dtype)
    wmu = jnp.zeros((f2, n_pad), mm_dtype).at[:, :n_actions].set(
        params["wmu"].astype(mm_dtype))
    bmu = jnp.zeros((1, n_pad), jnp.float32).at[:, :n_actions].set(
        params["bmu"].astype(jnp.float32))

    # Pack (bias, gamma, beta) per LayerNorm layer into one (3, f) array.
    ln1 = jnp.concatenate([params["b1"], params["g1"], params["be1"]], axis=0)
    ln2 = jnp.concatenate([params["b2"], params["g2"], params["be2"]], axis=0)

    cost = pl.CostEstimate(
        flops=2 * B * (in_dims * f1 + f1 * f2 + f2 * n_pad),
        transcendentals=B * (2 + n_pad),  # 2 rsqrt per row + tanh per out elem
        bytes_accessed=(B * in_dims * mm_isize + B * n_pad * 4
                        + (in_dims * f1 + f1 * f2 + f2 * n_pad) * mm_isize
                        + (3 * f1 + 3 * f2 + n_pad) * 4),
    )

    full = lambda shape: pl.BlockSpec(shape, lambda i: (0, 0))

    out_padded = pl.pallas_call(
        actor_kernel,
        out_shape=jax.ShapeDtypeStruct((B, n_pad), jnp.float32),
        grid_spec=pltpu.PrefetchScalarGridSpec(
            num_scalar_prefetch=0,
            grid=(B // block_b,),
            in_specs=[
                pl.BlockSpec((block_b, in_dims), lambda i: (i, 0)),  # state tile
                full((in_dims, f1)), full((3, f1)),
                full((f1, f2)),      full((3, f2)),
                full((f2, n_pad)),   full((1, n_pad)),
            ],
            out_specs=pl.BlockSpec((block_b, n_pad), lambda i: (i, 0)),
        ),
        compiler_params=pltpu.CompilerParams(
            dimension_semantics=("parallel",)),
        cost_estimate=cost,
    )(x, w1, ln1, w2, ln2, wmu, bmu)

    return out_padded[:, :n_actions]


def init_params(key, in_dims, fc1_dims, fc2_dims, n_actions):
    """Deterministic init mimicking torch defaults (uniform +-1/sqrt(fan_in);
    LayerNorm gamma=1, beta=0). Weights stored transposed: (in, out)."""
    ks = jax.random.split(key, 6)

    def linear(kw, kb, fan_in, fan_out):
        bound = 1.0 / jnp.sqrt(fan_in)
        w = jax.random.uniform(kw, (fan_in, fan_out), jnp.float32, -bound, bound)
        b = jax.random.uniform(kb, (1, fan_out), jnp.float32, -bound, bound)
        return w, b

    w1, b1 = linear(ks[0], ks[1], in_dims, fc1_dims)
    w2, b2 = linear(ks[2], ks[3], fc1_dims, fc2_dims)
    wmu, bmu = linear(ks[4], ks[5], fc2_dims, n_actions)
    return dict(
        w1=w1, b1=b1,
        g1=jnp.ones((1, fc1_dims), jnp.float32), be1=jnp.zeros((1, fc1_dims), jnp.float32),
        w2=w2, b2=b2,
        g2=jnp.ones((1, fc2_dims), jnp.float32), be2=jnp.zeros((1, fc2_dims), jnp.float32),
        wmu=wmu, bmu=bmu,
    )


def reference_forward(state, p):
    """Pure-JAX reference (semantics of the PyTorch module)."""
    def ln(h, g, b):
        m = jnp.mean(h, -1, keepdims=True)
        v = jnp.mean((h - m) ** 2, -1, keepdims=True)
        return (h - m) / jnp.sqrt(v + LN_EPS) * g + b

    h = jnp.maximum(ln(state @ p["w1"] + p["b1"], p["g1"], p["be1"]), 0.0)
    h = jnp.maximum(ln(h @ p["w2"] + p["b2"], p["g2"], p["be2"]), 0.0)
    return jnp.tanh(h @ p["wmu"] + p["bmu"])


if __name__ == "__main__":
    # Shapes consistent with the module: input_dims=(32,), fc1=64, fc2=64, n_actions=8
    batch, in_dims, fc1_dims, fc2_dims, n_actions = 64, 32, 64, 64, 8

    key = jax.random.PRNGKey(0)
    k_state, k_params = jax.random.split(key)
    state = jax.random.normal(k_state, (batch, in_dims), jnp.float32)
    params = init_params(k_params, in_dims, fc1_dims, fc2_dims, n_actions)

    ref = reference_forward(state, params)

    # f32 path (v5e-safe default): tight tolerance.
    out = jax.block_until_ready(actor_forward(state, params))
    assert out.shape == (batch, n_actions)
    assert jnp.max(jnp.abs(out - ref)) < 1e-5, "f32 mismatch vs reference"

    # bf16-matmul path (v6e/v7x): loose tolerance (bf16 input quantization).
    out_bf16 = jax.block_until_ready(
        actor_forward(state, params, use_bf16_matmul=True))
    assert out_bf16.shape == (batch, n_actions)
    assert bool(jnp.all(jnp.isfinite(out_bf16)))
    assert jnp.max(jnp.abs(out_bf16 - ref)) < 0.1, "bf16 mismatch vs reference"

    print("KERNEL_OK")
</pallas_src>

<mosaic_0001>
module attributes {stable_mosaic.version = 11 : i64} {
  func.func @actor_kernel(%arg0: i32, %arg1: memref<32x32xf32, #tpu.memory_space<vmem>>, %arg2: memref<32x64xf32, #tpu.memory_space<vmem>>, %arg3: memref<3x64xf32, #tpu.memory_space<vmem>>, %arg4: memref<64x64xf32, #tpu.memory_space<vmem>>, %arg5: memref<3x64xf32, #tpu.memory_space<vmem>>, %arg6: memref<64x128xf32, #tpu.memory_space<vmem>>, %arg7: memref<1x128xf32, #tpu.memory_space<vmem>>, %arg8: memref<32x128xf32, #tpu.memory_space<vmem>>) attributes {dimension_semantics = [#tpu.dimension_semantics<parallel>], iteration_bounds = array<i64: 2>, scalar_prefetch = 0 : i64, scratch_operands = 0 : i64, tpu.core_type = #tpu.core_type<tc>, window_params = [{transform_indices = @transform_0, window_bounds = array<i64: 32, 32>}, {pipeline_mode = #tpu.pipeline_mode<synchronous>, transform_indices = @transform_1, window_bounds = array<i64: 32, 64>}, {pipeline_mode = #tpu.pipeline_mode<synchronous>, transform_indices = @transform_2, window_bounds = array<i64: 3, 64>}, {pipeline_mode = #tpu.pipeline_mode<synchronous>, transform_indices = @transform_3, window_bounds = array<i64: 64, 64>}, {pipeline_mode = #tpu.pipeline_mode<synchronous>, transform_indices = @transform_4, window_bounds = array<i64: 3, 64>}, {pipeline_mode = #tpu.pipeline_mode<synchronous>, transform_indices = @transform_5, window_bounds = array<i64: 64, 128>}, {pipeline_mode = #tpu.pipeline_mode<synchronous>, transform_indices = @transform_6, window_bounds = array<i64: 1, 128>}, {transform_indices = @transform_7, window_bounds = array<i64: 32, 128>}]} {
    %c0 = arith.constant 0 : index
    %c0_0 = arith.constant 0 : index
    %0 = vector.load %arg1[%c0, %c0_0] : memref<32x32xf32, #tpu.memory_space<vmem>>, vector<32x32xf32>
    %c0_1 = arith.constant 0 : index
    %c0_2 = arith.constant 0 : index
    %1 = vector.load %arg3[%c0_1, %c0_2] : memref<3x64xf32, #tpu.memory_space<vmem>>, vector<3x64xf32>
    %c0_3 = arith.constant 0 : index
    %c0_4 = arith.constant 0 : index
    %2 = vector.load %arg2[%c0_3, %c0_4] : memref<32x64xf32, #tpu.memory_space<vmem>>, vector<32x64xf32>
    %cst = arith.constant dense<0.000000e+00> : vector<32x64xf32>
    %3 = tpu.matmul %0, %2, %cst {dimension_numbers = #tpu.dot_dimension_numbers<[1], [0], [0], [1], [0, 0, 1, 1], [], []>} : vector<32x32xf32>, vector<32x64xf32>, vector<32x64xf32> -> vector<32x64xf32>
    %4 = vector.extract_strided_slice %1 {offsets = [0, 0], sizes = [1, 64], strides = [1, 1]} : vector<3x64xf32> to vector<1x64xf32>
    %5 = vector.broadcast %4 : vector<1x64xf32> to vector<32x64xf32>
    %6 = arith.addf %3, %5 : vector<32x64xf32>
    %7 = vector.extract_strided_slice %1 {offsets = [1, 0], sizes = [1, 64], strides = [1, 1]} : vector<3x64xf32> to vector<1x64xf32>
    %8 = vector.extract_strided_slice %1 {offsets = [2, 0], sizes = [1, 64], strides = [1, 1]} : vector<3x64xf32> to vector<1x64xf32>
    %cst_5 = arith.constant dense<0.000000e+00> : vector<32xf32>
    %9 = vector.multi_reduction <add>, %6, %cst_5 [1] : vector<32x64xf32> to vector<32xf32>
    %10 = vector.shape_cast %9 : vector<32xf32> to vector<32x1xf32>
    %cst_6 = arith.constant 6.400000e+01 : f32
    %11 = vector.broadcast %cst_6 : f32 to vector<32x1xf32>
    %12 = arith.divf %10, %11 : vector<32x1xf32>
    %13 = vector.broadcast %12 : vector<32x1xf32> to vector<32x64xf32>
    %14 = arith.subf %6, %13 : vector<32x64xf32>
    %15 = arith.mulf %14, %14 : vector<32x64xf32>
    %cst_7 = arith.constant dense<0.000000e+00> : vector<32xf32>
    %16 = vector.multi_reduction <add>, %15, %cst_7 [1] : vector<32x64xf32> to vector<32xf32>
    %17 = vector.shape_cast %16 : vector<32xf32> to vector<32x1xf32>
    %cst_8 = arith.constant 6.400000e+01 : f32
    %18 = vector.broadcast %cst_8 : f32 to vector<32x1xf32>
    %19 = arith.divf %17, %18 : vector<32x1xf32>
    %cst_9 = arith.constant 9.99999974E-6 : f32
    %20 = vector.broadcast %cst_9 : f32 to vector<32x1xf32>
    %21 = arith.addf %19, %20 : vector<32x1xf32>
    %22 = math.rsqrt %21 : vector<32x1xf32>
    %23 = vector.broadcast %22 : vector<32x1xf32> to vector<32x64xf32>
    %24 = arith.mulf %14, %23 : vector<32x64xf32>
    %25 = vector.broadcast %7 : vector<1x64xf32> to vector<32x64xf32>
    %26 = arith.mulf %24, %25 : vector<32x64xf32>
    %27 = vector.broadcast %8 : vector<1x64xf32> to vector<32x64xf32>
    %28 = arith.addf %26, %27 : vector<32x64xf32>
    %cst_10 = arith.constant 0.000000e+00 : f32
    %29 = vector.broadcast %cst_10 : f32 to vector<32x64xf32>
    %30 = arith.maximumf %28, %29 : vector<32x64xf32>
    %c0_11 = arith.constant 0 : index
    %c0_12 = arith.constant 0 : index
    %31 = vector.load %arg5[%c0_11, %c0_12] : memref<3x64xf32, #tpu.memory_space<vmem>>, vector<3x64xf32>
    %c0_13 = arith.constant 0 : index
    %c0_14 = arith.constant 0 : index
    %32 = vector.load %arg4[%c0_13, %c0_14] : memref<64x64xf32, #tpu.memory_space<vmem>>, vector<64x64xf32>
    %cst_15 = arith.constant dense<0.000000e+00> : vector<32x64xf32>
    %33 = tpu.matmul %30, %32, %cst_15 {dimension_numbers = #tpu.dot_dimension_numbers<[1], [0], [0], [1], [0, 0, 1, 1], [], []>} : vector<32x64xf32>, vector<64x64xf32>, vector<32x64xf32> -> vector<32x64xf32>
    %34 = vector.extract_strided_slice %31 {offsets = [0, 0], sizes = [1, 64], strides = [1, 1]} : vector<3x64xf32> to vector<1x64xf32>
    %35 = vector.broadcast %34 : vector<1x64xf32> to vector<32x64xf32>
    %36 = arith.addf %33, %35 : vector<32x64xf32>
    %37 = vector.extract_strided_slice %31 {offsets = [1, 0], sizes = [1, 64], strides = [1, 1]} : vector<3x64xf32> to vector<1x64xf32>
    %38 = vector.extract_strided_slice %31 {offsets = [2, 0], sizes = [1, 64], strides = [1, 1]} : vector<3x64xf32> to vector<1x64xf32>
    %cst_16 = arith.constant dense<0.000000e+00> : vector<32xf32>
    %39 = vector.multi_reduction <add>, %36, %cst_16 [1] : vector<32x64xf32> to vector<32xf32>
    %40 = vector.shape_cast %39 : vector<32xf32> to vector<32x1xf32>
    %cst_17 = arith.constant 6.400000e+01 : f32
    %41 = vector.broadcast %cst_17 : f32 to vector<32x1xf32>
    %42 = arith.divf %40, %41 : vector<32x1xf32>
    %43 = vector.broadcast %42 : vector<32x1xf32> to vector<32x64xf32>
    %44 = arith.subf %36, %43 : vector<32x64xf32>
    %45 = arith.mulf %44, %44 : vector<32x64xf32>
    %cst_18 = arith.constant dense<0.000000e+00> : vector<32xf32>
    %46 = vector.multi_reduction <add>, %45, %cst_18 [1] : vector<32x64xf32> to vector<32xf32>
    %47 = vector.shape_cast %46 : vector<32xf32> to vector<32x1xf32>
    %cst_19 = arith.constant 6.400000e+01 : f32
    %48 = vector.broadcast %cst_19 : f32 to vector<32x1xf32>
    %49 = arith.divf %47, %48 : vector<32x1xf32>
    %cst_20 = arith.constant 9.99999974E-6 : f32
    %50 = vector.broadcast %cst_20 : f32 to vector<32x1xf32>
    %51 = arith.addf %49, %50 : vector<32x1xf32>
    %52 = math.rsqrt %51 : vector<32x1xf32>
    %53 = vector.broadcast %52 : vector<32x1xf32> to vector<32x64xf32>
    %54 = arith.mulf %44, %53 : vector<32x64xf32>
    %55 = vector.broadcast %37 : vector<1x64xf32> to vector<32x64xf32>
    %56 = arith.mulf %54, %55 : vector<32x64xf32>
    %57 = vector.broadcast %38 : vector<1x64xf32> to vector<32x64xf32>
    %58 = arith.addf %56, %57 : vector<32x64xf32>
    %cst_21 = arith.constant 0.000000e+00 : f32
    %59 = vector.broadcast %cst_21 : f32 to vector<32x64xf32>
    %60 = arith.maximumf %58, %59 : vector<32x64xf32>
    %c0_22 = arith.constant 0 : index
    %c0_23 = arith.constant 0 : index
    %61 = vector.load %arg6[%c0_22, %c0_23] : memref<64x128xf32, #tpu.memory_space<vmem>>, vector<64x128xf32>
    %cst_24 = arith.constant dense<0.000000e+00> : vector<32x128xf32>
    %62 = tpu.matmul %60, %61, %cst_24 {dimension_numbers = #tpu.dot_dimension_numbers<[1], [0], [0], [1], [0, 0, 1, 1], [], []>} : vector<32x64xf32>, vector<64x128xf32>, vector<32x128xf32> -> vector<32x128xf32>
    %c0_25 = arith.constant 0 : index
    %c0_26 = arith.constant 0 : index
    %63 = vector.load %arg7[%c0_25, %c0_26] : memref<1x128xf32, #tpu.memory_space<vmem>>, vector<1x128xf32>
    %64 = vector.broadcast %63 : vector<1x128xf32> to vector<32x128xf32>
    %65 = arith.addf %62, %64 : vector<32x128xf32>
    %66 = math.tanh %65 : vector<32x128xf32>
    %c0_27 = arith.constant 0 : index
    %c0_28 = arith.constant 0 : index
    %67 = vector.load %arg8[%c0_27, %c0_28] : memref<32x128xf32, #tpu.memory_space<vmem>>, vector<32x128xf32>
    tpu.vector_store %arg8[%c0_27, %c0_28], %66 {strides = array<i32>} : memref<32x128xf32, #tpu.memory_space<vmem>>, vector<32x128xf32>,
    return
  }
  func.func @transform_0(%arg0: i32) -> (i32, i32) {
    %c0_i32 = arith.constant 0 : i32
    %c0_i32_0 = arith.constant 0 : i32
    return %arg0, %c0_i32 : i32, i32
  }
  func.func @transform_1(%arg0: i32) -> (i32, i32) {
    %c0_i32 = arith.constant 0 : i32
    %c0_i32_0 = arith.constant 0 : i32
    %c0_i32_1 = arith.constant 0 : i32
    return %c0_i32, %c0_i32_0 : i32, i32
  }
  func.func @transform_2(%arg0: i32) -> (i32, i32) {
    %c0_i32 = arith.constant 0 : i32
    %c0_i32_0 = arith.constant 0 : i32
    %c0_i32_1 = arith.constant 0 : i32
    return %c0_i32, %c0_i32_0 : i32, i32
  }
  func.func @transform_3(%arg0: i32) -> (i32, i32) {
    %c0_i32 = arith.constant 0 : i32
    %c0_i32_0 = arith.constant 0 : i32
    %c0_i32_1 = arith.constant 0 : i32
    return %c0_i32, %c0_i32_0 : i32, i32
  }
  func.func @transform_4(%arg0: i32) -> (i32, i32) {
    %c0_i32 = arith.constant 0 : i32
    %c0_i32_0 = arith.constant 0 : i32
    %c0_i32_1 = arith.constant 0 : i32
    return %c0_i32, %c0_i32_0 : i32, i32
  }
  func.func @transform_5(%arg0: i32) -> (i32, i32) {
    %c0_i32 = arith.constant 0 : i32
    %c0_i32_0 = arith.constant 0 : i32
    %c0_i32_1 = arith.constant 0 : i32
    return %c0_i32, %c0_i32_0 : i32, i32
  }
  func.func @transform_6(%arg0: i32) -> (i32, i32) {
    %c0_i32 = arith.constant 0 : i32
    %c0_i32_0 = arith.constant 0 : i32
    %c0_i32_1 = arith.constant 0 : i32
    return %c0_i32, %c0_i32_0 : i32, i32
  }
  func.func @transform_7(%arg0: i32) -> (i32, i32) {
    %c0_i32 = arith.constant 0 : i32
    %c0_i32_0 = arith.constant 0 : i32
    return %arg0, %c0_i32 : i32, i32
  }
}

</mosaic_0001>

<llo_original>
// kernel: actor_forward.1
$region0: #{actor_forward.1}
  #allocation0 [shape = 'u32[]', space=smem, size = 0x4, offset = 0x4, fixed_abs, tag = 'smem constant byte address 0x4 - core index']
  #allocation1 [shape = 'u32[72,128]{1,0:T(1,128)}', space=vmem, size = 0x9000, scoped, tag = 'internal scratch']
  %s0 = inlined_call_operand.vmem [shape: f32[64,32], index: 0, kind: input, shape index: {}]
  %s1 = inlined_call_operand.vmem [shape: f32[32,64], index: 1, kind: input, shape index: {}]
  %s2 = inlined_call_operand.vmem [shape: f32[3,64], index: 2, kind: input, shape index: {}]
  %s3 = inlined_call_operand.vmem [shape: f32[64,64], index: 3, kind: input, shape index: {}]
  %s4 = inlined_call_operand.vmem [shape: f32[3,64], index: 4, kind: input, shape index: {}]
  %s5 = inlined_call_operand.vmem [shape: f32[64,128], index: 5, kind: input, shape index: {}]
  %s6 = inlined_call_operand.vmem [shape: f32[1,128], index: 6, kind: input, shape index: {}]
  %s7 = inlined_call_operand.vmem [shape: f32[64,128], index: 7, kind: output, shape index: {}]
  %s8 = sld [smem:[#allocation0]]
  $region61: #{actor_forward.1} parent=0
    _
  %s10 = ssub.s32 1, %s8
  %s11 = scalar_select 0, %s10, %s8
  loop: start=0, step=1, limit=4
  $region2: #{actor_forward.1} parent=0 // loop_pre_header
    _
  $region3: #{actor_forward.1} parent=0 // loop_header
    %s13 = sphi 0, %s17
    %p14 = scmp.ge.s32.totalorder %s13, 4
    %s23 = sphi 0, %s25
    %s26 = sphi 0, %s23
    %s27 = sphi 0, %s26
    %s43 = sphi 0, %s27
    %s47 = sphi 0, %s47
    %s49 = sphi 0, %s47
    %s50 = sphi 0, %s49
    %s64 = sphi 0, %s50
    %s68 = sphi 0, %s68
    %s70 = sphi 0, %s68
    %s71 = sphi 0, %s70
    %s85 = sphi 0, %s71
    %s89 = sphi 0, %s89
    %s91 = sphi 0, %s89
    %s92 = sphi 0, %s91
    %s106 = sphi 0, %s92
    %s110 = sphi 0, %s110
    %s112 = sphi 0, %s110
    %s113 = sphi 0, %s112
    %s127 = sphi 0, %s113
    %s131 = sphi 0, %s131
    %s133 = sphi 0, %s131
    %s134 = sphi 0, %s133
    %s148 = sphi 0, %s134
    %s152 = sphi 0, %s152
    %s154 = sphi 0, %s152
    %s155 = sphi 0, %s154
    %s169 = sphi 0, %s155
    %s175 = sphi 0, %s177
    %s178 = sphi 0, %s175
    %s179 = sphi 0, %s178
    %s195 = sphi 0, %s179
  $region4: #{actor_forward.1} parent=0 // loop_header_branch
    %16 = sbr.rel (%p14) target = $region8
  $region5: #{actor_forward.1} parent=0 // loop_body
    %s18 = ssub.s32 %s13, 1
    %s19 = ssub.s32 %s13, 2
    %s20 = sadd.s32 %s13, 1
    %s21 = ssub.s32 %s13, %s20
    %p22 = scmp.eq.s32.totalorder %s21, 0
    %s24 = sadd.s32 %s23, 1
    %s25 = scalar_select %p22, %s23, %s24
    %p28 = pneg %p22
    %p29 = scmp.eq.s32.totalorder %s13, 1
    %p30 = por %p28, %p29
    %p31 = scmp.ne.s32.totalorder %s23, %s26
    %p32 = scmp.eq.s32.totalorder %s13, 0
    %p33 = por %p31, %p32
    %p34 = scmp.ne.s32.totalorder %s23, %s26
    %p35 = scmp.eq.s32.totalorder %s18, 1
    %p36 = por %p34, %p35
    %p37 = scmp.ne.s32.totalorder %s26, %s27
    %p38 = scmp.eq.s32.totalorder %s18, 0
    %p39 = por %p37, %p38
    %p40 = scmp.ne.s32.totalorder %s26, %s27
    %p41 = scmp.eq.s32.totalorder %s19, 1
    %p42 = por %p40, %p41
    %p44 = scmp.ne.s32.totalorder %s27, %s43
    %p45 = scmp.eq.s32.totalorder %s19, 0
    %p46 = por %p44, %p45
    %s48 = sadd.s32 %s47, 1
    %p51 = scmp.eq.s32.totalorder %s13, 1
    %p52 = scmp.ne.s32.totalorder %s47, %s49
    %p53 = scmp.eq.s32.totalorder %s13, 0
    %p54 = por %p52, %p53
    %p55 = scmp.ne.s32.totalorder %s47, %s49
    %p56 = scmp.eq.s32.totalorder %s18, 1
    %p57 = por %p55, %p56
    %p58 = scmp.ne.s32.totalorder %s49, %s50
    %p59 = scmp.eq.s32.totalorder %s18, 0
    %p60 = por %p58, %p59
    %p61 = scmp.ne.s32.totalorder %s49, %s50
    %p62 = scmp.eq.s32.totalorder %s19, 1
    %p63 = por %p61, %p62
    %p65 = scmp.ne.s32.totalorder %s50, %s64
    %p66 = scmp.eq.s32.totalorder %s19, 0
    %p67 = por %p65, %p66
    %s69 = sadd.s32 %s68, 1
    %p72 = scmp.eq.s32.totalorder %s13, 1
    %p73 = scmp.ne.s32.totalorder %s68, %s70
    %p74 = scmp.eq.s32.totalorder %s13, 0
    %p75 = por %p73, %p74
    %p76 = scmp.ne.s32.totalorder %s68, %s70
    %p77 = scmp.eq.s32.totalorder %s18, 1
    %p78 = por %p76, %p77
    %p79 = scmp.ne.s32.totalorder %s70, %s71
    %p80 = scmp.eq.s32.totalorder %s18, 0
    %p81 = por %p79, %p80
    %p82 = scmp.ne.s32.totalorder %s70, %s71
    %p83 = scmp.eq.s32.totalorder %s19, 1
    %p84 = por %p82, %p83
    %p86 = scmp.ne.s32.totalorder %s71, %s85
    %p87 = scmp.eq.s32.totalorder %s19, 0
    %p88 = por %p86, %p87
    %s90 = sadd.s32 %s89, 1
    %p93 = scmp.eq.s32.totalorder %s13, 1
    %p94 = scmp.ne.s32.totalorder %s89, %s91
    %p95 = scmp.eq.s32.totalorder %s13, 0
    %p96 = por %p94, %p95
    %p97 = scmp.ne.s32.totalorder %s89, %s91
    %p98 = scmp.eq.s32.totalorder %s18, 1
    %p99 = por %p97, %p98
    %p100 = scmp.ne.s32.totalorder %s91, %s92
    %p101 = scmp.eq.s32.totalorder %s18, 0
    %p102 = por %p100, %p101
    %p103 = scmp.ne.s32.totalorder %s91, %s92
    %p104 = scmp.eq.s32.totalorder %s19, 1
    %p105 = por %p103, %p104
    %p107 = scmp.ne.s32.totalorder %s92, %s106
    %p108 = scmp.eq.s32.totalorder %s19, 0
    %p109 = por %p107, %p108
    %s111 = sadd.s32 %s110, 1
    %p114 = scmp.eq.s32.totalorder %s13, 1
    %p115 = scmp.ne.s32.totalorder %s110, %s112
    %p116 = scmp.eq.s32.totalorder %s13, 0
    %p117 = por %p115, %p116
    %p118 = scmp.ne.s32.totalorder %s110, %s112
    %p119 = scmp.eq.s32.totalorder %s18, 1
    %p120 = por %p118, %p119
    %p121 = scmp.ne.s32.totalorder %s112, %s113
    %p122 = scmp.eq.s32.totalorder %s18, 0
    %p123 = por %p121, %p122
    %p124 = scmp.ne.s32.totalorder %s112, %s113
    %p125 = scmp.eq.s32.totalorder %s19, 1
    %p126 = por %p124, %p125
    %p128 = scmp.ne.s32.totalorder %s113, %s127
    %p129 = scmp.eq.s32.totalorder %s19, 0
    %p130 = por %p128, %p129
    %s132 = sadd.s32 %s131, 1
    %p135 = scmp.eq.s32.totalorder %s13, 1
    %p136 = scmp.ne.s32.totalorder %s131, %s133
    %p137 = scmp.eq.s32.totalorder %s13, 0
    %p138 = por %p136, %p137
    %p139 = scmp.ne.s32.totalorder %s131, %s133
    %p140 = scmp.eq.s32.totalorder %s18, 1
    %p141 = por %p139, %p140
    %p142 = scmp.ne.s32.totalorder %s133, %s134
    %p143 = scmp.eq.s32.totalorder %s18, 0
    %p144 = por %p142, %p143
    %p145 = scmp.ne.s32.totalorder %s133, %s134
    %p146 = scmp.eq.s32.totalorder %s19, 1
    %p147 = por %p145, %p146
    %p149 = scmp.ne.s32.totalorder %s134, %s148
    %p150 = scmp.eq.s32.totalorder %s19, 0
    %p151 = por %p149, %p150
    %s153 = sadd.s32 %s152, 1
    %p156 = scmp.eq.s32.totalorder %s13, 1
    %p157 = scmp.ne.s32.totalorder %s152, %s154
    %p158 = scmp.eq.s32.totalorder %s13, 0
    %p159 = por %p157, %p158
    %p160 = scmp.ne.s32.totalorder %s152, %s154
    %p161 = scmp.eq.s32.totalorder %s18, 1
    %p162 = por %p160, %p161
    %p163 = scmp.ne.s32.totalorder %s154, %s155
    %p164 = scmp.eq.s32.totalorder %s18, 0
    %p165 = por %p163, %p164
    %p166 = scmp.ne.s32.totalorder %s154, %s155
    %p167 = scmp.eq.s32.totalorder %s19, 1
    %p168 = por %p166, %p167
    %p170 = scmp.ne.s32.totalorder %s155, %s169
    %p171 = scmp.eq.s32.totalorder %s19, 0
    %p172 = por %p170, %p171
    %s173 = ssub.s32 %s13, %s20
    %p174 = scmp.eq.s32.totalorder %s173, 0
    %s176 = sadd.s32 %s175, 1
    %s177 = scalar_select %p174, %s175, %s176
    %p180 = pneg %p174
    %p181 = scmp.eq.s32.totalorder %s13, 1
    %p182 = por %p180, %p181
    %p183 = scmp.ne.s32.totalorder %s175, %s178
    %p184 = scmp.eq.s32.totalorder %s13, 0
    %p185 = por %p183, %p184
    %p186 = scmp.ne.s32.totalorder %s175, %s178
    %p187 = scmp.eq.s32.totalorder %s18, 1
    %p188 = por %p186, %p187
    %p189 = scmp.ne.s32.totalorder %s178, %s179
    %p190 = scmp.eq.s32.totalorder %s18, 0
    %p191 = por %p189, %p190
    %p192 = scmp.ne.s32.totalorder %s178, %s179
    %p193 = scmp.eq.s32.totalorder %s19, 1
    %p194 = por %p192, %p193
    %p196 = scmp.ne.s32.totalorder %s179, %s195
    %p197 = scmp.eq.s32.totalorder %s19, 0
    %p198 = por %p196, %p197
    %p199 = scmp.le.s32.totalorder 1, %s13
    %p200 = scmp.lt.s32.totalorder %s13, 3
    %p201 = pnand %p199, %p200
    %p202 = pneg %p201
    // Predicated region
    $region9: #{actor_forward.1} parent=5 // pred_check
      _
    $region10: #{actor_forward.1} parent=5 // pred_check_branch
      %204 = sbr.rel (%p201) target = $region12
    $region11: #{actor_forward.1} parent=5 // pred_region
      %s205 = ssub.s32 %s13, 1
      // Predicated region
      $region13: #{actor_forward.1} parent=11 // pred_check
        %p206 = pneg %p60
      $region14: #{actor_forward.1} parent=11 // pred_check_branch
        %208 = sbr.rel (%p206) target = $region16
      $region15: #{actor_forward.1} parent=11 // pred_region
        _
      $region16: #{actor_forward.1} parent=11 // pred_fallthru
        _
      // Predicated region
      $region17: #{actor_forward.1} parent=11 // pred_check
        %p209 = pneg %p81
      $region18: #{actor_forward.1} parent=11 // pred_check_branch
        %211 = sbr.rel (%p209) target = $region20
      $region19: #{actor_forward.1} parent=11 // pred_region
        _
      $region20: #{actor_forward.1} parent=11 // pred_fallthru
        _
      // Predicated region
      $region21: #{actor_forward.1} parent=11 // pred_check
        %p212 = pneg %p102
      $region22: #{actor_forward.1} parent=11 // pred_check_branch
        %214 = sbr.rel (%p212) target = $region24
      $region23: #{actor_forward.1} parent=11 // pred_region
        _
      $region24: #{actor_forward.1} parent=11 // pred_fallthru
        _
      // Predicated region
      $region25: #{actor_forward.1} parent=11 // pred_check
        %p215 = pneg %p123
      $region26: #{actor_forward.1} parent=11 // pred_check_branch
        %217 = sbr.rel (%p215) target = $region28
      $region27: #{actor_forward.1} parent=11 // pred_region
        _
      $region28: #{actor_forward.1} parent=11 // pred_fallthru
        _
      // Predicated region
      $region29: #{actor_forward.1} parent=11 // pred_check
        %p218 = pneg %p144
      $region30: #{actor_forward.1} parent=11 // pred_check_branch
        %220 = sbr.rel (%p218) target = $region32
      $region31: #{actor_forward.1} parent=11 // pred_region
        _
      $region32: #{actor_forward.1} parent=11 // pred_fallthru
        _
      // Predicated region
      $region33: #{actor_forward.1} parent=11 // pred_check
        %p221 = pneg %p165
      $region34: #{actor_forward.1} parent=11 // pred_check_branch
        %223 = sbr.rel (%p221) target = $region36
      $region35: #{actor_forward.1} parent=11 // pred_region
        _
      $region36: #{actor_forward.1} parent=11 // pred_fallthru
        _
    $region12: #{actor_forward.1} parent=5 // pred_fallthru
      _
    %p224 = scmp.lt.s32.totalorder %s13, 2
    // Predicated region
    $region37: #{actor_forward.1} parent=5 // pred_check
      %p225 = pneg %p224
    $region38: #{actor_forward.1} parent=5 // pred_check_branch
      %227 = sbr.rel (%p225) target = $region40
    $region39: #{actor_forward.1} parent=5 // pred_region
      // Predicated region
      $region41: #{actor_forward.1} parent=39 // pred_check
        %p228 = pneg %p33
      $region42: #{actor_forward.1} parent=39 // pred_check_branch
        %230 = sbr.rel (%p228) target = $region44
      $region43: #{actor_forward.1} parent=39 // pred_region
        %s231 = smul.u32 4, %s13
        %p232 = scmp.lt.s32.totalorder %s231, 7
        %s233 = scalar_select %p232, %s231, 7
        %s234 = smul.addr %s233, 8
        %s235 = scalar_lea.vmem %s0, %s234
        %s236 = smul.u32 4, %s13
      $region44: #{actor_forward.1} parent=39 // pred_fallthru
        _
    $region40: #{actor_forward.1} parent=5 // pred_fallthru
      _
    %p237 = scmp.le.s32.totalorder 1, %s13
    %p238 = scmp.lt.s32.totalorder %s13, 3
    %p239 = pnand %p237, %p238
    %p240 = pneg %p239
    // Predicated region
    $region45: #{actor_forward.1} parent=5 // pred_check
      _
    $region46: #{actor_forward.1} parent=5 // pred_check_branch
      %242 = sbr.rel (%p239) target = $region48
    $region47: #{actor_forward.1} parent=5 // pred_region
      %s243 = ssub.s32 %s13, 1
      %s244 = smul.u32 4, %s18
      %p245 = scmp.lt.s32.totalorder %s244, 7
      %s246 = scalar_select %p245, %s244, 7
      %s247 = smul.addr %s246, 8
      %s248 = scalar_lea.vmem %s0, %s247
      %p249 = pneg %p39
      %p250 = pneg %p36
      %p251 = pneg %p60
      %p252 = pneg %p57
      %p253 = pneg %p81
      %p254 = pneg %p78
      %p255 = pneg %p102
      %p256 = pneg %p99
      %p257 = pneg %p123
      %p258 = pneg %p120
      %p259 = pneg %p144
      %p260 = pneg %p141
      %p261 = pneg %p165
      %p262 = pneg %p162
      %p263 = pneg %p191
      %p264 = pneg %p188
      %s265 = smul.u32 4, %s18
      %p266 = scmp.lt.s32.totalorder %s265, 7
      %s267 = scalar_select %p266, %s265, 7
      %s268 = smul.addr %s267, 8
      %s269 = scalar_lea.vmem %s7, %s268
      %s270 = smul.u32 4, %s18
      %p271 = scmp.lt.s32.totalorder %s270, 7
      %s272 = scalar_select %p271, %s270, 7
      %s273 = smul.addr %s272, 8
      %s274 = scalar_lea.vmem %s0, %s273
      %s275 = smul.u32 4, %s18
      %s276 = smul.u32 4, %s18
      %p277 = scmp.lt.s32.totalorder %s276, 7
      %s278 = scalar_select %p277, %s276, 7
      %s279 = smul.addr %s278, 8
      %s280 = scalar_lea.vmem %s7, %s279
      %s281 = smul.u32 4, %s18
      %v282 = vld [vmem:[%s274] sm:$0xff]
      %v283 = vld [vmem:[%s274 + $0x8] sm:$0xff]
      %v284 = vld [vmem:[%s274 + $0x10] sm:$0xff]
      %v285 = vld [vmem:[%s274 + $0x18] sm:$0xff]
      %v286 = vld [vmem:[%s2] sm:$0x7]
      %v287 = vld [vmem:[%s1] sm:$0xff]
      %v288 = vld [vmem:[%s1 + $0x8] sm:$0xff]
      %v289 = vld [vmem:[%s1 + $0x10] sm:$0xff]
      %v290 = vld [vmem:[%s1 + $0x18] sm:$0xff]
      %v291 = vperm.slane %v286, 0
      %vm292 = vcmask 261120
      %v294 = vsel %vm292, %v282, 0
      %v297 = vsel %vm292, %v283, 0
      %v300 = vsel %vm292, %v284, 0
      %v303 = vsel %vm292, %v285, 0
      %305 = vmatpush.msra.mxu0 0.0
      %306 = vmatpush.msra.mxu0 0.0
      %307 = vmatpush.msra.mxu0 0.0
      %308 = vmatpush.msra.mxu0 0.0
      %309 = vmatpush.msra.mxu0 0.0
      %310 = vmatpush.msra.mxu0 0.0
      %311 = vmatpush.msra.mxu0 0.0
      %312 = vmatpush.msra.mxu0 0.0
      %313 = vmatpush.msra.mxu0 0.0
      %314 = vmatpush.msra.mxu0 0.0
      %315 = vmatpush.msra.mxu0 0.0
      %316 = vmatpush.msra.mxu0 0.0
      %317 = vmatpush.msra.mxu0 %v290
      %318 = vmatpush.msra.mxu0 %v289
      %319 = vmatpush.msra.mxu0 %v288
      %320 = vmatpush.msra.mxu0 %v287
      %321 = vmatmul.f32.gmra.mxu0 %v294
      %v322 = vpop.f32.mrf.mxu0
      %v323 = vadd.f32 %v291, %v322
      %324 = vmatmul.f32.gmra.mxu0 %v297
      %v325 = vpop.f32.mrf.mxu0
      %v326 = vadd.f32 %v291, %v325
      %327 = vmatmul.f32.gmra.mxu0 %v300
      %v328 = vpop.f32.mrf.mxu0
      %v329 = vadd.f32 %v291, %v328
      %330 = vmatmul.f32.gmra.mxu0 %v303
      %v331 = vpop.f32.mrf.mxu0
      %v332 = vadd.f32 %v291, %v331
      %333 = vdwg.mxu0
      %vm334 = vcmask 523264
      %v335 = vsel %vm334, %v323, 0.0
      %336 = vadd.xlane.f32.xlu0 %v335
      %v337 = vpop.xlane.xlu0 %336
      %v338 = vsel %vm334, %v326, 0.0
      %339 = vadd.xlane.f32.xlu0 %v338
      %v340 = vpop.xlane.xlu0 %339
      %v341 = vsel %vm334, %v329, 0.0
      %342 = vadd.xlane.f32.xlu0 %v341
      %v343 = vpop.xlane.xlu0 %342
      %v344 = vsel %vm334, %v332, 0.0
      %345 = vadd.xlane.f32.xlu0 %v344
      %v346 = vpop.xlane.xlu0 %345
      %v347 = vrcp.pop 64.0
      %v348 = vmul.f32 64.0, %v347
      %v349 = vsub.f32 1.0, %v348
      %v350 = vmul.f32 %v347, %v349
      %v351 = vadd.f32 %v347, %v350
      %vm352 = vweird.f32 %v347
      %v353 = vsel %vm352, %v347, %v351
      %v354 = vmul.f32 %v337, %v353
      %v355 = vmul.f32 %v340, %v353
      %v356 = vmul.f32 %v343, %v353
      %v357 = vmul.f32 %v346, %v353
      %v358 = vsub.f32 %v323, %v354
      %v359 = vsub.f32 %v326, %v355
      %v360 = vsub.f32 %v329, %v356
      %v361 = vsub.f32 %v332, %v357
      %v362 = vmul.f32 %v358, %v358
      %v363 = vmul.f32 %v359, %v359
      %v364 = vmul.f32 %v360, %v360
      %v365 = vmul.f32 %v361, %v361
      %v366 = vsel %vm334, %v362, 0.0
      %367 = vadd.xlane.f32.xlu0 %v366
      %v368 = vpop.xlane.xlu0 %367
      %v369 = vsel %vm334, %v363, 0.0
      %370 = vadd.xlane.f32.xlu0 %v369
      %v371 = vpop.xlane.xlu0 %370
      %v372 = vsel %vm334, %v364, 0.0
      %373 = vadd.xlane.f32.xlu0 %v372
      %v374 = vpop.xlane.xlu0 %373
      %v375 = vsel %vm334, %v365, 0.0
      %376 = vadd.xlane.f32.xlu0 %v375
      %v377 = vpop.xlane.xlu0 %376
      %v378 = vmul.f32 %v368, %v353
      %v379 = vmul.f32 %v371, %v353
      %v380 = vmul.f32 %v374, %v353
      %v381 = vmul.f32 %v377, %v353
      %v382 = vadd.f32 %v378, 1e-05
      %v383 = vadd.f32 %v379, 1e-05
      %v384 = vadd.f32 %v380, 1e-05
      %v385 = vadd.f32 %v381, 1e-05
      %v386 = vrsqrt.pop %v382
      %v387 = vmul.f32 %v386, %v382
      %v388 = vmul.f32 %v387, %v386
      %v389 = vmul.f32 0.5, %v388
      %v390 = vsub.f32 1.5, %v389
      %v391 = vmul.f32 %v386, %v390
      %vm392 = vweird.f32 %v382
      %vm393 = vweird.f32 %v386
      %vm394 = vmor %vm392, %vm393
      %v395 = vsel %vm394, %v386, %v391
      %v396 = vrsqrt.pop %v383
      %v397 = vmul.f32 %v396, %v383
      %v398 = vmul.f32 %v397, %v396
      %v399 = vmul.f32 0.5, %v398
      %v400 = vsub.f32 1.5, %v399
      %v401 = vmul.f32 %v396, %v400
      %vm402 = vweird.f32 %v383
      %vm403 = vweird.f32 %v396
      %vm404 = vmor %vm402, %vm403
      %v405 = vsel %vm404, %v396, %v401
      %v406 = vrsqrt.pop %v384
      %v407 = vmul.f32 %v406, %v384
      %v408 = vmul.f32 %v407, %v406
      %v409 = vmul.f32 0.5, %v408
      %v410 = vsub.f32 1.5, %v409
      %v411 = vmul.f32 %v406, %v410
      %vm412 = vweird.f32 %v384
      %vm413 = vweird.f32 %v406
      %vm414 = vmor %vm412, %vm413
      %v415 = vsel %vm414, %v406, %v411
      %v416 = vrsqrt.pop %v385
      %v417 = vmul.f32 %v416, %v385
      %v418 = vmul.f32 %v417, %v416
      %v419 = vmul.f32 0.5, %v418
      %v420 = vsub.f32 1.5, %v419
      %v421 = vmul.f32 %v416, %v420
      %vm422 = vweird.f32 %v385
      %vm423 = vweird.f32 %v416
      %vm424 = vmor %vm422, %vm423
      %v425 = vsel %vm424, %v416, %v421
      %v426 = vmul.f32 %v358, %v395
      %v427 = vmul.f32 %v359, %v405
      %v428 = vmul.f32 %v360, %v415
      %v429 = vmul.f32 %v361, %v425
      %v430 = vperm.slane %v286, 1
      %v431 = vmul.f32 %v426, %v430
      %v432 = vmul.f32 %v427, %v430
      %v433 = vmul.f32 %v428, %v430
      %v434 = vmul.f32 %v429, %v430
      %v435 = vperm.slane %v286, 2
      %v436 = vadd.f32 %v431, %v435
      %v437 = vadd.f32 %v432, %v435
      %v438 = vadd.f32 %v433, %v435
      %v439 = vadd.f32 %v434, %v435
      %v440 = vmax.f32 %v436, 0.0
      %v441 = vmax.f32 %v437, 0.0
      %v442 = vmax.f32 %v438, 0.0
      %v443 = vmax.f32 %v439, 0.0
      %v444 = vld [vmem:[%s4] sm:$0x7]
      %v445 = vld [vmem:[%s3] sm:$0xff]
      %v446 = vld [vmem:[%s3 + $0x8] sm:$0xff]
      %v447 = vld [vmem:[%s3 + $0x10] sm:$0xff]
      %v448 = vld [vmem:[%s3 + $0x18] sm:$0xff]
      %v449 = vld [vmem:[%s3 + $0x20] sm:$0xff]
      %v450 = vld [vmem:[%s3 + $0x28] sm:$0xff]
      %v451 = vld [vmem:[%s3 + $0x30] sm:$0xff]
      %v452 = vld [vmem:[%s3 + $0x38] sm:$0xff]
      %v453 = vperm.slane %v444, 0
      %v455 = vsel %vm334, %v440, 0
      %v458 = vsel %vm334, %v441, 0
      %v461 = vsel %vm334, %v442, 0
      %v464 = vsel %vm334, %v443, 0
      %466 = vmatpush.msra.mxu0 0.0
      %467 = vmatpush.msra.mxu0 0.0
      %468 = vmatpush.msra.mxu0 0.0
      %469 = vmatpush.msra.mxu0 0.0
      %470 = vmatpush.msra.mxu0 0.0
      %471 = vmatpush.msra.mxu0 0.0
      %472 = vmatpush.msra.mxu0 0.0
      %473 = vmatpush.msra.mxu0 0.0
      %474 = vmatpush.msra.mxu0 %v452
      %475 = vmatpush.msra.mxu0 %v451
      %476 = vmatpush.msra.mxu0 %v450
      %477 = vmatpush.msra.mxu0 %v449
      %478 = vmatpush.msra.mxu0 %v448
      %479 = vmatpush.msra.mxu0 %v447
      %480 = vmatpush.msra.mxu0 %v446
      %481 = vmatpush.msra.mxu0 %v445
      %482 = vmatmul.f32.gmra.mxu0 %v455
      %v483 = vpop.f32.mrf.mxu0
      %v484 = vadd.f32 %v453, %v483
      %485 = vmatmul.f32.gmra.mxu0 %v458
      %v486 = vpop.f32.mrf.mxu0
      %v487 = vadd.f32 %v453, %v486
      %488 = vmatmul.f32.gmra.mxu0 %v461
      %v489 = vpop.f32.mrf.mxu0
      %v490 = vadd.f32 %v453, %v489
      %491 = vmatmul.f32.gmra.mxu0 %v464
      %v492 = vpop.f32.mrf.mxu0
      %v493 = vadd.f32 %v453, %v492
      %494 = vdwg.mxu0
      %v495 = vsel %vm334, %v484, 0.0
      %496 = vadd.xlane.f32.xlu0 %v495
      %v497 = vpop.xlane.xlu0 %496
      %v498 = vsel %vm334, %v487, 0.0
      %499 = vadd.xlane.f32.xlu0 %v498
      %v500 = vpop.xlane.xlu0 %499
      %v501 = vsel %vm334, %v490, 0.0
      %502 = vadd.xlane.f32.xlu0 %v501
      %v503 = vpop.xlane.xlu0 %502
      %v504 = vsel %vm334, %v493, 0.0
      %505 = vadd.xlane.f32.xlu0 %v504
      %v506 = vpop.xlane.xlu0 %505
      %v507 = vmul.f32 %v497, %v353
      %v508 = vmul.f32 %v500, %v353
      %v509 = vmul.f32 %v503, %v353
      %v510 = vmul.f32 %v506, %v353
      %v511 = vsub.f32 %v484, %v507
      %v512 = vsub.f32 %v487, %v508
      %v513 = vsub.f32 %v490, %v509
      %v514 = vsub.f32 %v493, %v510
      %v515 = vmul.f32 %v511, %v511
      %v516 = vmul.f32 %v512, %v512
      %v517 = vmul.f32 %v513, %v513
      %v518 = vmul.f32 %v514, %v514
      %v519 = vsel %vm334, %v515, 0.0
      %520 = vadd.xlane.f32.xlu0 %v519
      %v521 = vpop.xlane.xlu0 %520
      %v522 = vsel %vm334, %v516, 0.0
      %523 = vadd.xlane.f32.xlu0 %v522
      %v524 = vpop.xlane.xlu0 %523
      %v525 = vsel %vm334, %v517, 0.0
      %526 = vadd.xlane.f32.xlu0 %v525
      %v527 = vpop.xlane.xlu0 %526
      %v528 = vsel %vm334, %v518, 0.0
      %529 = vadd.xlane.f32.xlu0 %v528
      %v530 = vpop.xlane.xlu0 %529
      %v531 = vmul.f32 %v521, %v353
      %v532 = vmul.f32 %v524, %v353
      %v533 = vmul.f32 %v527, %v353
      %v534 = vmul.f32 %v530, %v353
      %v535 = vadd.f32 %v531, 1e-05
      %v536 = vadd.f32 %v532, 1e-05
      %v537 = vadd.f32 %v533, 1e-05
      %v538 = vadd.f32 %v534, 1e-05
      %v539 = vrsqrt.pop %v535
      %v540 = vmul.f32 %v539, %v535
      %v541 = vmul.f32 %v540, %v539
      %v542 = vmul.f32 0.5, %v541
      %v543 = vsub.f32 1.5, %v542
      %v544 = vmul.f32 %v539, %v543
      %vm545 = vweird.f32 %v535
      %vm546 = vweird.f32 %v539
      %vm547 = vmor %vm545, %vm546
      %v548 = vsel %vm547, %v539, %v544
      %v549 = vrsqrt.pop %v536
      %v550 = vmul.f32 %v549, %v536
      %v551 = vmul.f32 %v550, %v549
      %v552 = vmul.f32 0.5, %v551
      %v553 = vsub.f32 1.5, %v552
      %v554 = vmul.f32 %v549, %v553
      %vm555 = vweird.f32 %v536
      %vm556 = vweird.f32 %v549
      %vm557 = vmor %vm555, %vm556
      %v558 = vsel %vm557, %v549, %v554
      %v559 = vrsqrt.pop %v537
      %v560 = vmul.f32 %v559, %v537
      %v561 = vmul.f32 %v560, %v559
      %v562 = vmul.f32 0.5, %v561
      %v563 = vsub.f32 1.5, %v562
      %v564 = vmul.f32 %v559, %v563
      %vm565 = vweird.f32 %v537
      %vm566 = vweird.f32 %v559
      %vm567 = vmor %vm565, %vm566
      %v568 = vsel %vm567, %v559, %v564
      %v569 = vrsqrt.pop %v538
      %v570 = vmul.f32 %v569, %v538
      %v571 = vmul.f32 %v570, %v569
      %v572 = vmul.f32 0.5, %v571
      %v573 = vsub.f32 1.5, %v572
      %v574 = vmul.f32 %v569, %v573
      %vm575 = vweird.f32 %v538
      %vm576 = vweird.f32 %v569
      %vm577 = vmor %vm575, %vm576
      %v578 = vsel %vm577, %v569, %v574
      %v579 = vmul.f32 %v511, %v548
      %v580 = vmul.f32 %v512, %v558
      %v581 = vmul.f32 %v513, %v568
      %v582 = vmul.f32 %v514, %v578
      %v583 = vperm.slane %v444, 1
      %v584 = vmul.f32 %v579, %v583
      %v585 = vmul.f32 %v580, %v583
      %v586 = vmul.f32 %v581, %v583
      %v587 = vmul.f32 %v582, %v583
      %v588 = vperm.slane %v444, 2
      %v589 = vadd.f32 %v584, %v588
      %v590 = vadd.f32 %v585, %v588
      %v591 = vadd.f32 %v586, %v588
      %v592 = vadd.f32 %v587, %v588
      %v593 = vmax.f32 %v589, 0.0
      %v594 = vmax.f32 %v590, 0.0
      %v595 = vmax.f32 %v591, 0.0
      %v596 = vmax.f32 %v592, 0.0
      %v597 = vld [vmem:[%s5] sm:$0xff]
      %v598 = vld [vmem:[%s5 + $0x8] sm:$0xff]
      %v599 = vld [vmem:[%s5 + $0x10] sm:$0xff]
      %v600 = vld [vmem:[%s5 + $0x18] sm:$0xff]
      %v601 = vld [vmem:[%s5 + $0x20] sm:$0xff]
      %v602 = vld [vmem:[%s5 + $0x28] sm:$0xff]
      %v603 = vld [vmem:[%s5 + $0x30] sm:$0xff]
      %v604 = vld [vmem:[%s5 + $0x38] sm:$0xff]
      %v605 = vld [vmem:[%s6] sm:$0x1]
      %v607 = vperm.slane %v605, 0
      %v610 = vsel %vm334, %v593, 0
      %v613 = vsel %vm334, %v594, 0
      %v616 = vsel %vm334, %v595, 0
      %v619 = vsel %vm334, %v596, 0
      %621 = vmatpush.msra.mxu0 0.0
      %622 = vmatpush.msra.mxu0 0.0
      %623 = vmatpush.msra.mxu0 0.0
      %624 = vmatpush.msra.mxu0 0.0
      %625 = vmatpush.msra.mxu0 0.0
      %626 = vmatpush.msra.mxu0 0.0
      %627 = vmatpush.msra.mxu0 0.0
      %628 = vmatpush.msra.mxu0 0.0
      %629 = vmatpush.msra.mxu0 %v604
      %630 = vmatpush.msra.mxu0 %v603
      %631 = vmatpush.msra.mxu0 %v602
      %632 = vmatpush.msra.mxu0 %v601
      %633 = vmatpush.msra.mxu0 %v600
      %634 = vmatpush.msra.mxu0 %v599
      %635 = vmatpush.msra.mxu0 %v598
      %636 = vmatpush.msra.mxu0 %v597
      %637 = vmatmul.f32.gmra.mxu0 %v610
      %v638 = vpop.f32.mrf.mxu0
      %v639 = vadd.f32 %v607, %v638
      %640 = vmatmul.f32.gmra.mxu0 %v613
      %v641 = vpop.f32.mrf.mxu0
      %v642 = vadd.f32 %v607, %v641
      %643 = vmatmul.f32.gmra.mxu0 %v616
      %v644 = vpop.f32.mrf.mxu0
      %v645 = vadd.f32 %v607, %v644
      %646 = vmatmul.f32.gmra.mxu0 %v619
      %v647 = vpop.f32.mrf.mxu0
      %v648 = vadd.f32 %v607, %v647
      %649 = vdwg.mxu0
      %v650 = vtanh.pop %v639
      %v651 = vtanh.pop %v642
      %v652 = vtanh.pop %v645
      %v653 = vtanh.pop %v648
      %654 = vst [vmem:[%s280] sm:$0xff] %v650
      %655 = vst [vmem:[%s280 + $0x8] sm:$0xff] %v651
      %656 = vst [vmem:[%s280 + $0x10] sm:$0xff] %v652
      %657 = vst [vmem:[%s280 + $0x18] sm:$0xff] %v653
      %s658 = smul.u32 4, %s18
      %p659 = scmp.lt.s32.totalorder %s658, 7
      %s660 = scalar_select %p659, %s658, 7
      %s661 = smul.addr %s660, 8
      %s662 = scalar_lea.vmem %s7, %s661
      // Predicated region
      $region49: #{actor_forward.1} parent=47 // pred_check
        %p663 = pneg %p188
      $region50: #{actor_forward.1} parent=47 // pred_check_branch
        %665 = sbr.rel (%p663) target = $region52
      $region51: #{actor_forward.1} parent=47 // pred_region
        %s666 = smul.u32 4, %s18
      $region52: #{actor_forward.1} parent=47 // pred_fallthru
        _
    $region48: #{actor_forward.1} parent=5 // pred_fallthru
      _
    %p667 = scmp.le.s32.totalorder 2, %s13
    // Predicated region
    $region53: #{actor_forward.1} parent=5 // pred_check
      %p668 = pneg %p667
    $region54: #{actor_forward.1} parent=5 // pred_check_branch
      %670 = sbr.rel (%p668) target = $region56
    $region55: #{actor_forward.1} parent=5 // pred_region
      %s671 = ssub.s32 %s13, 2
      // Predicated region
      $region57: #{actor_forward.1} parent=55 // pred_check
        %p672 = pneg %p194
      $region58: #{actor_forward.1} parent=55 // pred_check_branch
        %674 = sbr.rel (%p672) target = $region60
      $region59: #{actor_forward.1} parent=55 // pred_region
        %s675 = smul.u32 4, %s19
        %p676 = scmp.lt.s32.totalorder %s675, 7
        %s677 = scalar_select %p676, %s675, 7
        %s678 = smul.addr %s677, 8
        %s679 = scalar_lea.vmem %s7, %s678
      $region60: #{actor_forward.1} parent=55 // pred_fallthru
        _
    $region56: #{actor_forward.1} parent=5 // pred_fallthru
      _
  $region6: #{actor_forward.1} parent=0 // loop_footer
    %s17 = sadd.s32 1, %s13
  $region7: #{actor_forward.1} parent=0 // loop_footer_branch
    %12 = sbr.rel target = $region3
  $region8: #{actor_forward.1} parent=0 // loop_exit
    _

</llo_original>
